<compile_context>
chip_gen: v5e
topology: v5e:2x2
jax: 0.10.0
libtpu: 0.0.40
codegen_flags: <defaults>
</compile_context>

<pallas_src>
import jax
import jax.numpy as jnp
from jax.experimental import pallas as pl
from jax.experimental.pallas import tpu as pltpu

_MiB = 1024 * 1024


def _vmem_limit_bytes():
    """Scoped-VMEM request: ~3/4 of physical VMEM, capped at 96 MiB (=> ~48 MiB on v7x)."""
    try:
        cap = int(pltpu.get_tpu_info().vmem_capacity_bytes)
    except Exception:  # fall back to a value safe on every generation
        cap = 64 * _MiB
    return int(min(96 * _MiB, (cap * 3) // 4))


# ---------------------------------------------------------------------------
# encoder (stand-in): global average pool + linear, batch-tiled
# ---------------------------------------------------------------------------
def encoder_kernel(x_ref, we_ref, be_ref, y_ref, ybf_ref):
    # x_ref: (tb, C, H*W) bf16   we_ref: (C, FEAT) bf16   be_ref: (1, FEAT) f32
    pooled = jnp.mean(x_ref[...].astype(jnp.float32), axis=-1)      # GAP -> (tb, C), f32 acc
    # TODO(synk): for very large H*W a ones-vector matmul on the MXU beats the XLU reduce.
    y = jnp.dot(pooled.astype(jnp.bfloat16), we_ref[...],
                preferred_element_type=jnp.float32) + be_ref[...]
    y_ref[...] = y                                # f32 y (module output)
    ybf_ref[...] = y.astype(jnp.bfloat16)         # bf16 copy for the fused MLP (no round trip)


def encoder_forward(x, we_bf16, be, *, tb=32):
    B, C, H, W = x.shape
    feat = we_bf16.shape[1]
    # Input pipeline should supply bf16 images; this cast is a no-op in that case.
    xf = x.reshape(B, C, H * W).astype(jnp.bfloat16)
    tb = min(tb, B)
    y, y_bf = pl.pallas_call(
        encoder_kernel,
        grid=(pl.cdiv(B, tb),),
        in_specs=[
            pl.BlockSpec((tb, C, H * W), lambda i: (i, 0, 0)),
            pl.BlockSpec((C, feat), lambda i: (0, 0)),
            pl.BlockSpec((1, feat), lambda i: (0, 0)),
        ],
        out_specs=(
            pl.BlockSpec((tb, feat), lambda i: (i, 0)),
            pl.BlockSpec((tb, feat), lambda i: (i, 0)),
        ),
        out_shape=(
            jax.ShapeDtypeStruct((B, feat), jnp.float32),
            jax.ShapeDtypeStruct((B, feat), jnp.bfloat16),
        ),
        compiler_params=pltpu.CompilerParams(
            dimension_semantics=("parallel",),
            vmem_limit_bytes=_vmem_limit_bytes(),
        ),
    )(xf, we_bf16, be)
    return y, y_bf


# ---------------------------------------------------------------------------
# fused projector + predictor
#   grid = (batch_tile, phase, hidden_tile)
#   phase 0 -> z = MLP_proj(y),  phase 1 -> h = MLP_pred(z); z stays resident in VMEM.
# ---------------------------------------------------------------------------
def fused_mlp_kernel(y_ref,
                     pw1_ref, psc_ref, psh_ref, pw2_ref, pb2_ref,
                     qw1_ref, qsc_ref, qsh_ref, qw2_ref, qb2_ref,
                     z_ref, h_ref,
                     acc_ref, zbuf_ref):
    phase = pl.program_id(1)
    k = pl.program_id(2)
    last_k = pl.num_programs(2) - 1

    @pl.when(k == 0)
    def _():
        acc_ref[...] = jnp.zeros_like(acc_ref)

    def mlp_step(x_bf16, w1_ref, sc_ref, sh_ref, w2_ref):
        t = jnp.dot(x_bf16, w1_ref[...], preferred_element_type=jnp.float32)
        t = t * sc_ref[...] + sh_ref[...]        # folded eval-mode BatchNorm1d
        t = jnp.maximum(t, 0.0)                  # ReLU
        acc_ref[...] += jnp.dot(t.astype(jnp.bfloat16), w2_ref[...],
                                preferred_element_type=jnp.float32)

    @pl.when(phase == 0)                         # projector: z = MLP(y)
    def _():
        mlp_step(y_ref[...], pw1_ref, psc_ref, psh_ref, pw2_ref)

        @pl.when(k == last_k)
        def _():
            z = acc_ref[...] + pb2_ref[...]
            zbuf_ref[...] = z.astype(zbuf_ref.dtype)   # bf16, resident for phase 1
            z_ref[...] = z.astype(z_ref.dtype)

    @pl.when(phase == 1)                         # predictor: h = MLP(z)
    def _():
        mlp_step(zbuf_ref[...], qw1_ref, qsc_ref, qsh_ref, qw2_ref)

        @pl.when(k == last_k)
        def _():
            h_ref[...] = (acc_ref[...] + qb2_ref[...]).astype(h_ref.dtype)


def projector_predictor_forward(y_bf16, proj_prep, pred_prep, *, tk=1024, tb=256):
    B, feat = y_bf16.shape
    pw1, psc, psh, pw2, pb2 = proj_prep
    qw1, qsc, qsh, qw2, qb2 = pred_prep
    hidden = pw1.shape[1]
    out_dim = pw2.shape[1]
    assert qw1.shape == (out_dim, hidden) and qw2.shape == (hidden, out_dim)
    assert pw1.dtype == jnp.bfloat16 and qw1.dtype == jnp.bfloat16, \
        "call prepare_mlp_params() once outside the hot path"

    tk = min(tk, hidden)
    assert hidden % tk == 0 and tk % 128 == 0, "tile must divide HIDDEN and be lane-aligned"
    kt = hidden // tk

    tb = min(tb, B)
    bt = pl.cdiv(B, tb)

    # Phase 0 streams projector tiles (index k) and parks predictor tiles at block 0;
    # phase 1 parks projector tiles on their last block (no re-DMA) and streams predictor tiles.
    def proj_k(p, k):
        return (1 - p) * k + p * (kt - 1)

    def pred_k(p, k):
        return p * k

    in_specs = [
        pl.BlockSpec((tb, feat), lambda b, p, k: (b, 0)),                 # y (resident per batch tile)
        pl.BlockSpec((feat, tk), lambda b, p, k: (0, proj_k(p, k))),      # proj W1 tile
        pl.BlockSpec((1, tk), lambda b, p, k: (0, proj_k(p, k))),         # proj BN scale
        pl.BlockSpec((1, tk), lambda b, p, k: (0, proj_k(p, k))),         # proj BN shift
        pl.BlockSpec((tk, out_dim), lambda b, p, k: (proj_k(p, k), 0)),   # proj W2 tile
        pl.BlockSpec((1, out_dim), lambda b, p, k: (0, 0)),               # proj b2
        pl.BlockSpec((out_dim, tk), lambda b, p, k: (0, pred_k(p, k))),   # pred W1 tile
        pl.BlockSpec((1, tk), lambda b, p, k: (0, pred_k(p, k))),         # pred BN scale
        pl.BlockSpec((1, tk), lambda b, p, k: (0, pred_k(p, k))),         # pred BN shift
        pl.BlockSpec((tk, out_dim), lambda b, p, k: (pred_k(p, k), 0)),   # pred W2 tile
        pl.BlockSpec((1, out_dim), lambda b, p, k: (0, 0)),               # pred b2
    ]
    out_specs = (
        pl.BlockSpec((tb, out_dim), lambda b, p, k: (b, 0)),              # z
        pl.BlockSpec((tb, out_dim), lambda b, p, k: (b, 0)),              # h
    )

    z, h = pl.pallas_call(
        fused_mlp_kernel,
        grid=(bt, 2, kt),
        in_specs=in_specs,
        out_specs=out_specs,
        out_shape=(jax.ShapeDtypeStruct((B, out_dim), jnp.float32),
                   jax.ShapeDtypeStruct((B, out_dim), jnp.float32)),
        scratch_shapes=[
            pltpu.VMEM((tb, out_dim), jnp.float32),   # matmul accumulator
            pltpu.VMEM((tb, out_dim), jnp.bfloat16),  # z resident across phases (bf16)
        ],
        compiler_params=pltpu.CompilerParams(
            dimension_semantics=("parallel", "arbitrary", "arbitrary"),
            vmem_limit_bytes=_vmem_limit_bytes(),
        ),
    )(y_bf16, pw1, psc, psh, pw2, pb2,
      qw1, qsc, qsh, qw2, qb2)
    return z, h


def siamese_arm_forward(x, enc_prep, proj_prep, pred_prep, *, tk=1024,
                        enc_tb=32, mlp_tb=256):
    # For BYOL, concatenate both augmented views along batch before calling so the
    # ~23 MB weight stream (the dominant HBM cost of the MLPs) is paid once per step.
    y, y_bf = encoder_forward(x, *enc_prep, tb=enc_tb)        # encoder(x)[0]
    z, h = projector_predictor_forward(y_bf, proj_prep, pred_prep, tk=tk, tb=mlp_tb)
    return y, z, h


# ---------------------------------------------------------------------------
# one-time parameter preparation (outside the per-forward hot path)
# ---------------------------------------------------------------------------
def _fold_bn(gamma, beta, rmean, rvar, eps=1e-5):
    scale = gamma * jax.lax.rsqrt(rvar + eps)
    shift = beta - rmean * scale
    return scale, shift


def prepare_mlp_params(params, eps=1e-5):
    """Fold eval-mode BN into (scale, shift); cast streamed weights to bf16 ONCE."""
    w1, gamma, beta, rmean, rvar, w2, b2 = params
    scale, shift = _fold_bn(gamma, beta, rmean, rvar, eps)
    return (w1.astype(jnp.bfloat16), scale.astype(jnp.float32),
            shift.astype(jnp.float32), w2.astype(jnp.bfloat16),
            b2.astype(jnp.float32))


def prepare_encoder_params(params):
    we, be = params
    return (we.astype(jnp.bfloat16), be.astype(jnp.float32))


def init_mlp_params(key, in_dim, hidden, out_dim):
    k1, k2 = jax.random.split(key)
    w1 = jax.random.normal(k1, (in_dim, hidden), jnp.float32) * (1.0 / jnp.sqrt(in_dim))
    gamma = jnp.ones((1, hidden), jnp.float32)
    beta = jnp.zeros((1, hidden), jnp.float32)
    rmean = jnp.zeros((1, hidden), jnp.float32)
    rvar = jnp.ones((1, hidden), jnp.float32)
    w2 = jax.random.normal(k2, (hidden, out_dim), jnp.float32) * (1.0 / jnp.sqrt(hidden))
    b2 = jnp.zeros((1, out_dim), jnp.float32)
    return (w1, gamma, beta, rmean, rvar, w2, b2)


if __name__ == "__main__":
    # Small stand-in shapes (real module: feat 2048, hidden 4096, proj/pred out 256;
    # tk=1024 there gives kt=4 and a ~14 MiB working set, within v7x's VMEM).
    B, C, H, W = 2, 4, 16, 16
    FEAT, HIDDEN, OUT = 256, 512, 128

    root = jax.random.PRNGKey(0)
    k_x, k_enc, k_proj, k_pred = jax.random.split(root, 4)

    x = jax.random.normal(k_x, (B, C, H, W), jnp.float32)

    # stand-in encoder params: GAP + linear C -> FEAT
    we = jax.random.normal(k_enc, (C, FEAT), jnp.float32) * (1.0 / jnp.sqrt(C))
    be = jnp.zeros((1, FEAT), jnp.float32)

    # One-time prep: BN fold + bf16 weight cast (outside the hot path).
    enc_prep = prepare_encoder_params((we, be))
    proj_prep = prepare_mlp_params(init_mlp_params(k_proj, FEAT, HIDDEN, OUT))  # FEAT->HIDDEN->OUT
    pred_prep = prepare_mlp_params(init_mlp_params(k_pred, OUT, HIDDEN, OUT))   # OUT ->HIDDEN->OUT
    jax.block_until_ready((enc_prep, proj_prep, pred_prep))

    y, z, h = siamese_arm_forward(x, enc_prep, proj_prep, pred_prep, tk=1024)
    jax.block_until_ready((y, z, h))

    assert y.shape == (B, FEAT) and z.shape == (B, OUT) and h.shape == (B, OUT)
    assert y.dtype == z.dtype == h.dtype == jnp.float32
    assert bool(jnp.all(jnp.isfinite(y))) and bool(jnp.all(jnp.isfinite(z))) \
        and bool(jnp.all(jnp.isfinite(h)))

    print("KERNEL_OK")
</pallas_src>

<mosaic_0001>
module attributes {stable_mosaic.version = 11 : i64} {
  func.func @encoder_kernel(%arg0: i32, %arg1: memref<2x4x256xbf16, #tpu.memory_space<vmem>>, %arg2: memref<4x256xbf16, #tpu.memory_space<vmem>>, %arg3: memref<1x256xf32, #tpu.memory_space<vmem>>, %arg4: memref<2x256xf32, #tpu.memory_space<vmem>>, %arg5: memref<2x256xbf16, #tpu.memory_space<vmem>>) attributes {dimension_semantics = [#tpu.dimension_semantics<parallel>], iteration_bounds = array<i64: 1>, scalar_prefetch = 0 : i64, scratch_operands = 0 : i64, tpu.core_type = #tpu.core_type<tc>, window_params = [{transform_indices = @transform_0, window_bounds = array<i64: 2, 4, 256>}, {pipeline_mode = #tpu.pipeline_mode<synchronous>, transform_indices = @transform_1, window_bounds = array<i64: 4, 256>}, {pipeline_mode = #tpu.pipeline_mode<synchronous>, transform_indices = @transform_2, window_bounds = array<i64: 1, 256>}, {transform_indices = @transform_3, window_bounds = array<i64: 2, 256>}, {transform_indices = @transform_4, window_bounds = array<i64: 2, 256>}]} {
    %c0 = arith.constant 0 : index
    %c0_0 = arith.constant 0 : index
    %c0_1 = arith.constant 0 : index
    %0 = vector.load %arg1[%c0, %c0_0, %c0_1] : memref<2x4x256xbf16, #tpu.memory_space<vmem>>, vector<2x4x256xbf16>
    %1 = arith.extf %0 : vector<2x4x256xbf16> to vector<2x4x256xf32>
    %cst = arith.constant dense<0.000000e+00> : vector<2x4xf32>
    %2 = vector.multi_reduction <add>, %1, %cst [2] : vector<2x4x256xf32> to vector<2x4xf32>
    %cst_2 = arith.constant 2.560000e+02 : f32
    %3 = vector.broadcast %cst_2 : f32 to vector<2x4xf32>
    %4 = arith.divf %2, %3 : vector<2x4xf32>
    %5 = arith.truncf %4 : vector<2x4xf32> to vector<2x4xbf16>
    %c0_3 = arith.constant 0 : index
    %c0_4 = arith.constant 0 : index
    %6 = vector.load %arg2[%c0_3, %c0_4] : memref<4x256xbf16, #tpu.memory_space<vmem>>, vector<4x256xbf16>
    %cst_5 = arith.constant dense<0.000000e+00> : vector<2x256xf32>
    %7 = tpu.matmul %5, %6, %cst_5 {dimension_numbers = #tpu.dot_dimension_numbers<[1], [0], [0], [1], [0, 0, 1, 1], [], []>} : vector<2x4xbf16>, vector<4x256xbf16>, vector<2x256xf32> -> vector<2x256xf32>
    %c0_6 = arith.constant 0 : index
    %c0_7 = arith.constant 0 : index
    %8 = vector.load %arg3[%c0_6, %c0_7] : memref<1x256xf32, #tpu.memory_space<vmem>>, vector<1x256xf32>
    %9 = vector.broadcast %8 : vector<1x256xf32> to vector<2x256xf32>
    %10 = arith.addf %7, %9 : vector<2x256xf32>
    %c0_8 = arith.constant 0 : index
    %c0_9 = arith.constant 0 : index
    %11 = vector.load %arg4[%c0_8, %c0_9] : memref<2x256xf32, #tpu.memory_space<vmem>>, vector<2x256xf32>
    tpu.vector_store %arg4[%c0_8, %c0_9], %10 {strides = array<i32>} : memref<2x256xf32, #tpu.memory_space<vmem>>, vector<2x256xf32>,
    %12 = arith.truncf %10 : vector<2x256xf32> to vector<2x256xbf16>
    %c0_10 = arith.constant 0 : index
    %c0_11 = arith.constant 0 : index
    %13 = vector.load %arg5[%c0_10, %c0_11] : memref<2x256xbf16, #tpu.memory_space<vmem>>, vector<2x256xbf16>
    tpu.vector_store %arg5[%c0_10, %c0_11], %12 {strides = array<i32>} : memref<2x256xbf16, #tpu.memory_space<vmem>>, vector<2x256xbf16>,
    return
  }
  func.func @transform_0(%arg0: i32) -> (i32, i32, i32) {
    %c0_i32 = arith.constant 0 : i32
    %c0_i32_0 = arith.constant 0 : i32
    %c0_i32_1 = arith.constant 0 : i32
    return %arg0, %c0_i32, %c0_i32_0 : i32, i32, i32
  }
  func.func @transform_1(%arg0: i32) -> (i32, i32) {
    %c0_i32 = arith.constant 0 : i32
    %c0_i32_0 = arith.constant 0 : i32
    %c0_i32_1 = arith.constant 0 : i32
    return %c0_i32, %c0_i32_0 : i32, i32
  }
  func.func @transform_2(%arg0: i32) -> (i32, i32) {
    %c0_i32 = arith.constant 0 : i32
    %c0_i32_0 = arith.constant 0 : i32
    %c0_i32_1 = arith.constant 0 : i32
    return %c0_i32, %c0_i32_0 : i32, i32
  }
  func.func @transform_3(%arg0: i32) -> (i32, i32) {
    %c0_i32 = arith.constant 0 : i32
    %c0_i32_0 = arith.constant 0 : i32
    return %arg0, %c0_i32 : i32, i32
  }
  func.func @transform_4(%arg0: i32) -> (i32, i32) {
    %c0_i32 = arith.constant 0 : i32
    %c0_i32_0 = arith.constant 0 : i32
    return %arg0, %c0_i32 : i32, i32
  }
}

</mosaic_0001>

<llo_original>
// kernel: tpu_custom_call.1
$region0: #{tpu_custom_call.1}
  #allocation0 [shape = 'u32[]', space=smem, size = 0x4, offset = 0x4, fixed_abs, tag = 'smem constant byte address 0x4 - core index']
  #allocation1 [shape = 'u32[72,128]{1,0:T(1,128)}', space=vmem, size = 0x9000, scoped, tag = 'internal scratch']
  %s0 = inlined_call_operand.hbm [shape: bf16[2,4,256], index: 0, kind: input, shape index: {}]
  %s1 = inlined_call_operand.hbm [shape: bf16[4,256], index: 1, kind: input, shape index: {}]
  %s2 = inlined_call_operand.hbm [shape: f32[1,256], index: 2, kind: input, shape index: {}]
  %s3 = inlined_call_operand.hbm [shape: f32[2,256], index: 3, kind: output, shape index: {0}]
  %s4 = inlined_call_operand.hbm [shape: bf16[2,256], index: 4, kind: output, shape index: {1}]
  %5 = xla_tuple %s3, %s4
  %s6 = sld [smem:[#allocation0]]
  $region42: #{tpu_custom_call.1} parent=0
    _
  %s8 = ssub.s32 1, %s6
  %s9 = scalar_select 0, %s8, %s6
  $region1: #{tpu_custom_call.1} parent=0
    #allocation2 [shape = 'u8[4096]{0}', space=vmem, size = 0x1000, scoped, tag = 'input window, operand 0, single buffered']
    #allocation3 [shape = 's32[1]{0}', space=sflag, size = 0x4, scoped, tag = 'scoped memory for tpu_custom_call.1']
    #allocation4 [shape = 's32[1]{0}', space=sflag, size = 0x4, scoped, tag = 'scoped memory for tpu_custom_call.1']
    #allocation5 [shape = 'u8[2048]{0}', space=vmem, size = 0x800, scoped, tag = 'input window, operand 1, single buffered']
    #allocation6 [shape = 's32[1]{0}', space=sflag, size = 0x4, scoped, tag = 'scoped memory for tpu_custom_call.1']
    #allocation7 [shape = 'u8[1024]{0}', space=vmem, size = 0x400, scoped, tag = 'input window, operand 2, single buffered']
    #allocation8 [shape = 'u8[2048]{0}', space=vmem, size = 0x800, scoped, tag = 'output window, operand 0, single buffered']
    #allocation9 [shape = 'u8[1024]{0}', space=vmem, size = 0x400, scoped, tag = 'output window, operand 1, single buffered']
    #allocation10 [shape = 's32[1]{0}', space=sflag, size = 0x4, scoped, tag = 'scoped memory for tpu_custom_call.1']
    %10 = vsyncpa [#allocation3], 0
    %11 = vsyncpa [#allocation6], 0
    %12 = vsyncpa [#allocation4], 0
    %13 = vsyncpa [#allocation10], 0
    // Predicated region
    $region2: #{tpu_custom_call.1} parent=1 // pred_check
      _
    $region3: #{tpu_custom_call.1} parent=1 // pred_check_branch
      %15 = sbr.rel (0) target = $region5
    $region4: #{tpu_custom_call.1} parent=1 // pred_region
      %17 = vsyncadd [#allocation3], 0
      %s18 = sshll.u32 %s0, 4
      %s19 = int_to_ptr.hbm [resolvable:$true] %s18
      %s20 = sshll.u32 [#allocation2], 4
      %s21 = int_to_ptr.vmem [resolvable:$true] %s20
      %26 = dma.hbm_to_vmem [thread:$0]  %s19, 128, %s21, [#allocation3], 64, 64, 4
    $region5: #{tpu_custom_call.1} parent=1 // pred_fallthru
      _
    // Predicated region
    $region6: #{tpu_custom_call.1} parent=1 // pred_check
      _
    $region7: #{tpu_custom_call.1} parent=1 // pred_check_branch
      %28 = sbr.rel (0) target = $region9
    $region8: #{tpu_custom_call.1} parent=1 // pred_region
      %30 = vsyncadd [#allocation6], 0
      %s32 = sshll.u32 %s1, 4
      %s33 = int_to_ptr.hbm [resolvable:$true] %s32
      %s34 = sshll.u32 [#allocation5], 4
      %s35 = int_to_ptr.vmem [resolvable:$true] %s34
      %37 = dma.hbm_to_vmem [thread:$0]  %s33, 64, %s35, [#allocation6]
    $region9: #{tpu_custom_call.1} parent=1 // pred_fallthru
      _
    // Predicated region
    $region10: #{tpu_custom_call.1} parent=1 // pred_check
      _
    $region11: #{tpu_custom_call.1} parent=1 // pred_check_branch
      %39 = sbr.rel (0) target = $region13
    $region12: #{tpu_custom_call.1} parent=1 // pred_region
      %41 = vsyncadd [#allocation6], 0
      %s43 = sshll.u32 %s2, 4
      %s44 = int_to_ptr.hbm [resolvable:$true] %s43
      %s45 = sshll.u32 [#allocation7], 4
      %s46 = int_to_ptr.vmem [resolvable:$true] %s45
      %48 = dma.hbm_to_vmem [thread:$0]  %s44, 32, %s46, [#allocation6]
    $region13: #{tpu_custom_call.1} parent=1 // pred_fallthru
      _
    // Predicated region
    $region14: #{tpu_custom_call.1} parent=1 // pred_check
      _
    $region15: #{tpu_custom_call.1} parent=1 // pred_check_branch
      %50 = sbr.rel (0) target = $region17
    $region16: #{tpu_custom_call.1} parent=1 // pred_region
      %52 = dma.done [#allocation3], 128
    $region17: #{tpu_custom_call.1} parent=1 // pred_fallthru
      _
    // Predicated region
    $region18: #{tpu_custom_call.1} parent=1 // pred_check
      _
    $region19: #{tpu_custom_call.1} parent=1 // pred_check_branch
      %54 = sbr.rel (0) target = $region21
    $region20: #{tpu_custom_call.1} parent=1 // pred_region
      %56 = dma.done [#allocation6], 64
    $region21: #{tpu_custom_call.1} parent=1 // pred_fallthru
      _
    // Predicated region
    $region22: #{tpu_custom_call.1} parent=1 // pred_check
      _
    $region23: #{tpu_custom_call.1} parent=1 // pred_check_branch
      %58 = sbr.rel (0) target = $region25
    $region24: #{tpu_custom_call.1} parent=1 // pred_region
      %60 = dma.done [#allocation6], 32
    $region25: #{tpu_custom_call.1} parent=1 // pred_fallthru
      _
    %v62 = vld [vmem:[#allocation2] sm:$0xf]
    %v63 = vld [vmem:[#allocation2 + $0x4] sm:$0xf]
    %v64 = vunpack.c.l.bf16 %v62
    %v65 = vunpack.c.l.bf16 %v63
    %68 = vst [vmem:[#allocation1] ss:$2 sm:$0xff] %v64
    %v69 = vld.sshfl [vmem:[#allocation1] sm:$0xff pattern:$0x75316420]
    %v70 = vld.sshfl [vmem:[#allocation1 + $0x8] sm:$0xff pattern:$0x75316420]
    %s71 = scalar_lea.vmem [#allocation1], 16
    %72 = vst [vmem:[%s71] ss:$2 sm:$0xff] %v65
    %v73 = vld.sshfl [vmem:[#allocation1 + $0x10] sm:$0xff pattern:$0x75316420]
    %v74 = vld.sshfl [vmem:[#allocation1 + $0x18] sm:$0xff pattern:$0x75316420]
    %vm79 = vcmask 1043456
    %v80 = vsel %vm79, %v69, 0.0
    %v81 = vsel %vm79, %v70, 0.0
    %v82 = vadd.f32 %v80, %v81
    %83 = vadd.xlane.f32.xlu0 %v82
    %v84 = vpop.xlane.xlu0 %83
    %v85 = vsel %vm79, %v73, 0.0
    %v86 = vsel %vm79, %v74, 0.0
    %v87 = vadd.f32 %v85, %v86
    %88 = vadd.xlane.f32.xlu0 %v87
    %v89 = vpop.xlane.xlu0 %88
    %v90 = vrcp.pop 256.0
    %v91 = vmul.f32 256.0, %v90
    %v92 = vsub.f32 1.0, %v91
    %v93 = vmul.f32 %v90, %v92
    %v94 = vadd.f32 %v90, %v93
    %vm95 = vweird.f32 %v90
    %v96 = vsel %vm95, %v90, %v94
    %v97 = vmul.f32 %v84, %v96
    %v98 = vmul.f32 %v89, %v96
    %v99 = vpack.c.bf16 %v97, %v97
    %v100 = vpack.c.bf16 %v98, %v98
    %v101 = vld [vmem:[#allocation5] sm:$0xf]
    %v102 = vld [vmem:[#allocation7] sm:$0x3]
    %v104 = vperm.slane %v102, 0
    %v105 = vperm.slane %v102, 1
    %v110 = vunpack.c.l.b16 %v99
    %v111 = vunpack.c.l.b16 %v100
    %v112 = vlaneseq
    %v113 = vand.u32 %v112, 127
    %v114 = vperm.slane %v110, %v113
    %v115 = vperm.slane %v111, %v113
    %vm116 = vcmask 1041409
    %v117 = vsel %vm116, %v115, %v114
    %v118 = vpack.c.b16 %v117, %v117
    %120 = vst [vmem:[#allocation1] ss:$4 sm:$0xff] %v101
    %v121 = vld.sshfl [vmem:[#allocation1] sm:$0xff pattern:$0x73625140]
    %v122 = vld.sshfl [vmem:[#allocation1 + $0x8] sm:$0xff pattern:$0x73625140]
    %vm123 = vcmask 31744
    %v125 = vsel %vm123, %v118, 0
    %vm127 = vcmask 1041408
    %v128 = vsel %vm127, %v121, 0
    %v130 = vsel %vm127, %v122, 0
    %132 = vmatpush.bf16.msra.mxu0 0
    %133 = vmatpush.bf16.msra.mxu0 0
    %134 = vmatpush.bf16.msra.mxu0 0
    %135 = vmatpush.bf16.msra.mxu0 0
    %136 = vmatpush.bf16.msra.mxu0 0
    %137 = vmatpush.bf16.msra.mxu0 0
    %138 = vmatpush.bf16.msra.mxu0 0
    %139 = vmatpush.bf16.msra.mxu0 %v128
    %140 = vmatmul.bf16.gmra.mxu0 %v125
    %v141 = vpop.f32.mrf.mxu0
    %v142 = vadd.f32 %v104, %v141
    %v143 = vpop.f32.mrf.mxu0
    %144 = vdwg.mxu0
    %145 = vmatpush.bf16.msra.mxu0 0
    %146 = vmatpush.bf16.msra.mxu0 0
    %147 = vmatpush.bf16.msra.mxu0 0
    %148 = vmatpush.bf16.msra.mxu0 0
    %149 = vmatpush.bf16.msra.mxu0 0
    %150 = vmatpush.bf16.msra.mxu0 0
    %151 = vmatpush.bf16.msra.mxu0 0
    %152 = vmatpush.bf16.msra.mxu0 %v130
    %153 = vmatmul.bf16.gmra.mxu0 %v125
    %v154 = vpop.f32.mrf.mxu0
    %v155 = vadd.f32 %v105, %v154
    %v156 = vpop.f32.mrf.mxu0
    %157 = vdwg.mxu0
    %v160 = vrot.slane %v155, 6
    %v161 = vsel %vm127, %v142, %v160
    %163 = vst [vmem:[#allocation8] sm:$0xf] %v161
    %v164 = vpack.c.bf16 %v155, %v142
    %v166 = vrot.slane %v164, 3
    %vm167 = vcmask 1040384
    %v170 = vsel %vm167, %v164, %v166
    %172 = vst [vmem:[#allocation9] sm:$0x3] %v170
    // Predicated region
    $region26: #{tpu_custom_call.1} parent=1 // pred_check
      _
    $region27: #{tpu_custom_call.1} parent=1 // pred_check_branch
      %174 = sbr.rel (0) target = $region29
    $region28: #{tpu_custom_call.1} parent=1 // pred_region
      %176 = vsyncadd [#allocation4], 0
      %s178 = sshll.u32 [#allocation8], 4
      %s179 = int_to_ptr.vmem [resolvable:$true] %s178
      %s180 = sshll.u32 %s3, 4
      %s181 = int_to_ptr.hbm [resolvable:$true] %s180
      %183 = dma.vmem_to_hbm [thread:$0]  %s179, 64, %s181, [#allocation4]
    $region29: #{tpu_custom_call.1} parent=1 // pred_fallthru
      _
    // Predicated region
    $region30: #{tpu_custom_call.1} parent=1 // pred_check
      _
    $region31: #{tpu_custom_call.1} parent=1 // pred_check_branch
      %185 = sbr.rel (0) target = $region33
    $region32: #{tpu_custom_call.1} parent=1 // pred_region
      %187 = vsyncadd [#allocation10], 0
      %s189 = sshll.u32 [#allocation9], 4
      %s190 = int_to_ptr.vmem [resolvable:$true] %s189
      %s191 = sshll.u32 %s4, 4
      %s192 = int_to_ptr.hbm [resolvable:$true] %s191
      %194 = dma.vmem_to_hbm [thread:$0]  %s190, 32, %s192, [#allocation10]
    $region33: #{tpu_custom_call.1} parent=1 // pred_fallthru
      _
    // Predicated region
    $region34: #{tpu_custom_call.1} parent=1 // pred_check
      _
    $region35: #{tpu_custom_call.1} parent=1 // pred_check_branch
      %196 = sbr.rel (0) target = $region37
    $region36: #{tpu_custom_call.1} parent=1 // pred_region
      %198 = dma.done [#allocation4], 64
    $region37: #{tpu_custom_call.1} parent=1 // pred_fallthru
      _
    // Predicated region
    $region38: #{tpu_custom_call.1} parent=1 // pred_check
      _
    $region39: #{tpu_custom_call.1} parent=1 // pred_check_branch
      %200 = sbr.rel (0) target = $region41
    $region40: #{tpu_custom_call.1} parent=1 // pred_region
      %202 = dma.done [#allocation10], 32
    $region41: #{tpu_custom_call.1} parent=1 // pred_fallthru
      _
    %203 = vsyncpa [#allocation3], 1
    %204 = vsyncpa [#allocation6], 1
    %205 = vsyncpa [#allocation4], 1
    %206 = vsyncpa [#allocation10], 1

</llo_original>
